<compile_context>
chip_gen: v6e
topology: v6e:2x2x1
jax: 0.10.0
libtpu: 0.0.40
codegen_flags: <defaults>
</compile_context>

<pallas_src>
import math

import jax
import jax.numpy as jnp
from jax.experimental import pallas as pl
from jax.experimental.pallas import tpu as pltpu


_INV_SQRT2 = 0.7071067811865476

# Abramowitz & Stegun 7.1.26 erf approximation coefficients (max abs err ~1.5e-7).
_P = 0.3275911
_A1 = 0.254829592
_A2 = -0.284496736
_A3 = 1.421413741
_A4 = -1.453152027
_A5 = 1.061405429


def _gelu_kernel(x_ref, o_ref):
    """GeLU on one lane-dense (block_rows, n_lanes) tile; math in f32.

    With z = x/sqrt(2), t = 1/(1 + p*|z|), h = 0.5*x*poly(t)*exp(-z^2):
        gelu(x) = h        for x <  0
                = x - h    for x >= 0
    (equivalent to 0.5*x*(1+erf(z)) under the A&S 7.1.26 erf approximation,
    but ~3 fewer VALU ops/element than forming erf explicitly).
    """
    x = x_ref[...].astype(jnp.float32)
    z = x * _INV_SQRT2
    a = jnp.abs(z)
    d = 1.0 + _P * a
    # EUP approximate reciprocal + one Newton-Raphson step: ~full f32 accuracy
    # while moving the bulk of the divide off the VALU slot.
    t = pl.reciprocal(d, approx=True)
    t = t * (2.0 - d * t)
    poly = t * (_A1 + t * (_A2 + t * (_A3 + t * (_A4 + t * _A5))))
    h = 0.5 * x * poly * jnp.exp(-z * z)
    out = jnp.where(x < 0.0, h, x - h)
    o_ref[...] = out.astype(o_ref.dtype)


def _round_up(v, m):
    return ((v + m - 1) // m) * m


def _largest_divisor_multiple(total, step, cap):
    """Largest b <= cap with b % step == 0 and total % b == 0 (or None)."""
    b = (cap // step) * step
    while b >= step:
        if total % b == 0:
            return b
        b -= step
    return None


def _pick_lanes(block_elems):
    """Widest lane count such that the block is (mult-of-8 rows, lanes)."""
    for lanes in (2048, 1024, 512, 256, 128):
        if block_elems % (8 * lanes) == 0:
            return lanes
    return None  # unreachable for block_elems % 1024 == 0


def _pick_padfree_layout(total, target_block_elems, min_grid):
    """Return (n_lanes, block_rows, grid_len) that tiles `total` exactly, or None."""
    if total % 128 != 0:
        return None
    if total % 1024 == 0:
        # Prefer >= min_grid steps (v7x two-TC sharding), then >= 2, as long
        # as blocks do not become pointlessly small.
        for g, floor in ((min_grid, 64 * 1024), (2, 1024)):
            cap = min(target_block_elems, total // g)
            cap = (cap // 1024) * 1024
            if cap < floor:
                continue
            b = _largest_divisor_multiple(total, 1024, cap)
            if b is None:
                continue
            lanes = _pick_lanes(b)
            return lanes, b // lanes, total // b
    # Single full-array block (small or awkwardly factored inputs).
    if total <= max(target_block_elems, 1 << 20):
        for lanes in (2048, 1024, 512, 256, 128):
            if total % lanes == 0:
                return lanes, total // lanes, 1
    return None


def _run_tiles(x2d, block_rows, n_lanes, grid_len):
    return pl.pallas_call(
        _gelu_kernel,
        out_shape=jax.ShapeDtypeStruct(x2d.shape, x2d.dtype),
        grid_spec=pltpu.PrefetchScalarGridSpec(
            num_scalar_prefetch=0,
            grid=(grid_len,),
            in_specs=[pl.BlockSpec((block_rows, n_lanes), lambda i: (i, 0))],
            out_specs=pl.BlockSpec((block_rows, n_lanes), lambda i: (i, 0)),
        ),
        compiler_params=pltpu.CompilerParams(
            dimension_semantics=("parallel",)),
    )(x2d)


def gelu_pallas(x, *, target_block_bytes=2 * 1024 * 1024, min_grid=8):
    """erf-based GeLU over an arbitrarily shaped array via a Pallas TPU kernel."""
    orig_shape = x.shape
    total = math.prod(orig_shape) if orig_shape else 1
    if total == 0:
        return x
    itemsize = jnp.dtype(x.dtype).itemsize
    target_block_elems = max(1024, target_block_bytes // itemsize)

    flat = x.reshape(-1)

    layout = _pick_padfree_layout(total, target_block_elems, min_grid)
    if layout is not None:
        # Common case: pure reshape in/out (free for contiguous arrays) —
        # no pad, no post-slice, hence no extra HBM passes.
        n_lanes, block_rows, grid_len = layout
        x2d = flat.reshape(total // n_lanes, n_lanes)
        out2d = _run_tiles(x2d, block_rows, n_lanes, grid_len)
        return out2d.reshape(orig_shape)

    # Fallback for element counts that don't tile cleanly: zero-pad to a
    # (rows, 128) slab; GeLU(0) == 0 and padded rows are sliced off afterwards.
    n_lanes = 128 if total >= 128 else total
    rows = pl.cdiv(total, n_lanes)
    if rows <= 8 or n_lanes < 128:
        block_rows = rows  # single full-array block (tiny input)
    else:
        max_block_rows = max(8, ((target_block_elems // n_lanes) // 8) * 8)
        grid_cap = max(8, _round_up(pl.cdiv(rows, min_grid), 8))
        block_rows = min(max_block_rows, grid_cap)
    padded_rows = _round_up(rows, block_rows)
    padded_total = padded_rows * n_lanes
    if padded_total != total:
        flat = jnp.pad(flat, (0, padded_total - total))
    x2d = flat.reshape(padded_rows, n_lanes)
    out2d = _run_tiles(x2d, block_rows, n_lanes, padded_rows // block_rows)
    return out2d.reshape(-1)[:total].reshape(orig_shape)


if __name__ == "__main__":
    key = jax.random.PRNGKey(0)

    # Elementwise activation over [batch, seq, hidden] (small, pad-free path:
    # total = 2048 elements -> 2 grid steps of (8, 128)).
    B, S, H = 2, 8, 128
    x = jax.random.normal(key, (B, S, H), jnp.float32)
    out = jax.block_until_ready(gelu_pallas(x))
    ref = jax.nn.gelu(x, approximate=False)  # erf-based GeLU
    assert out.shape == x.shape
    assert jnp.allclose(out, ref, atol=1e-5, rtol=1e-5), "mismatch vs reference"

    # Awkward element count (not a multiple of 128) -> exercises pad fallback.
    x2 = jax.random.normal(jax.random.PRNGKey(1), (2, 5, 96), jnp.float32)
    out2 = jax.block_until_ready(gelu_pallas(x2))
    ref2 = jax.nn.gelu(x2, approximate=False)
    assert out2.shape == x2.shape
    assert jnp.allclose(out2, ref2, atol=1e-5, rtol=1e-5), "mismatch vs reference (pad path)"

    print("KERNEL_OK")
</pallas_src>

<mosaic_0001>
module attributes {stable_mosaic.version = 11 : i64} {
  func.func @_gelu_kernel(%arg0: i32, %arg1: memref<8x128xf32, #tpu.memory_space<vmem>>, %arg2: memref<8x128xf32, #tpu.memory_space<vmem>>) attributes {dimension_semantics = [#tpu.dimension_semantics<parallel>], iteration_bounds = array<i64: 2>, scalar_prefetch = 0 : i64, scratch_operands = 0 : i64, tpu.core_type = #tpu.core_type<tc>, window_params = [{transform_indices = @transform_0, window_bounds = array<i64: 8, 128>}, {transform_indices = @transform_1, window_bounds = array<i64: 8, 128>}]} {
    %c0 = arith.constant 0 : index
    %c0_0 = arith.constant 0 : index
    %0 = vector.load %arg1[%c0, %c0_0] : memref<8x128xf32, #tpu.memory_space<vmem>>, vector<8x128xf32>
    %cst = arith.constant 0.707106769 : f32
    %1 = vector.broadcast %cst : f32 to vector<8x128xf32>
    %2 = arith.mulf %0, %1 : vector<8x128xf32>
    %3 = math.absf %2 : vector<8x128xf32>
    %cst_1 = arith.constant 0.327591091 : f32
    %4 = vector.broadcast %cst_1 : f32 to vector<8x128xf32>
    %5 = arith.mulf %4, %3 : vector<8x128xf32>
    %cst_2 = arith.constant 1.000000e+00 : f32
    %6 = vector.broadcast %cst_2 : f32 to vector<8x128xf32>
    %7 = arith.addf %6, %5 : vector<8x128xf32>
    %8 = tpu.reciprocal %7 {approx = true} : vector<8x128xf32> -> vector<8x128xf32>
    %9 = arith.mulf %7, %8 : vector<8x128xf32>
    %cst_3 = arith.constant 2.000000e+00 : f32
    %10 = vector.broadcast %cst_3 : f32 to vector<8x128xf32>
    %11 = arith.subf %10, %9 : vector<8x128xf32>
    %12 = arith.mulf %8, %11 : vector<8x128xf32>
    %cst_4 = arith.constant 1.06140542 : f32
    %13 = vector.broadcast %cst_4 : f32 to vector<8x128xf32>
    %14 = arith.mulf %12, %13 : vector<8x128xf32>
    %cst_5 = arith.constant -1.45315206 : f32
    %15 = vector.broadcast %cst_5 : f32 to vector<8x128xf32>
    %16 = arith.addf %15, %14 : vector<8x128xf32>
    %17 = arith.mulf %12, %16 : vector<8x128xf32>
    %cst_6 = arith.constant 1.42141378 : f32
    %18 = vector.broadcast %cst_6 : f32 to vector<8x128xf32>
    %19 = arith.addf %18, %17 : vector<8x128xf32>
    %20 = arith.mulf %12, %19 : vector<8x128xf32>
    %cst_7 = arith.constant -0.284496725 : f32
    %21 = vector.broadcast %cst_7 : f32 to vector<8x128xf32>
    %22 = arith.addf %21, %20 : vector<8x128xf32>
    %23 = arith.mulf %12, %22 : vector<8x128xf32>
    %cst_8 = arith.constant 0.254829586 : f32
    %24 = vector.broadcast %cst_8 : f32 to vector<8x128xf32>
    %25 = arith.addf %24, %23 : vector<8x128xf32>
    %26 = arith.mulf %12, %25 : vector<8x128xf32>
    %cst_9 = arith.constant 5.000000e-01 : f32
    %27 = vector.broadcast %cst_9 : f32 to vector<8x128xf32>
    %28 = arith.mulf %27, %0 : vector<8x128xf32>
    %29 = arith.mulf %28, %26 : vector<8x128xf32>
    %cst_10 = arith.constant 0.000000e+00 : f32
    %30 = vector.broadcast %cst_10 : f32 to vector<8x128xf32>
    %31 = arith.subf %30, %2 : vector<8x128xf32>
    %32 = arith.mulf %31, %2 : vector<8x128xf32>
    %33 = math.exp %32 : vector<8x128xf32>
    %34 = arith.mulf %29, %33 : vector<8x128xf32>
    %cst_11 = arith.constant 0.000000e+00 : f32
    %35 = vector.broadcast %cst_11 : f32 to vector<8x128xf32>
    %36 = arith.cmpf olt, %0, %35 : vector<8x128xf32>
    %37 = arith.subf %0, %34 : vector<8x128xf32>
    %38 = arith.select %36, %34, %37 : vector<8x128xi1>, vector<8x128xf32>
    %c0_12 = arith.constant 0 : index
    %c0_13 = arith.constant 0 : index
    %39 = vector.load %arg2[%c0_12, %c0_13] : memref<8x128xf32, #tpu.memory_space<vmem>>, vector<8x128xf32>
    tpu.vector_store %arg2[%c0_12, %c0_13], %38 {strides = array<i32>} : memref<8x128xf32, #tpu.memory_space<vmem>>, vector<8x128xf32>,
    return
  }
  func.func @transform_0(%arg0: i32) -> (i32, i32) {
    %c0_i32 = arith.constant 0 : i32
    %c0_i32_0 = arith.constant 0 : i32
    return %arg0, %c0_i32 : i32, i32
  }
  func.func @transform_1(%arg0: i32) -> (i32, i32) {
    %c0_i32 = arith.constant 0 : i32
    %c0_i32_0 = arith.constant 0 : i32
    return %arg0, %c0_i32 : i32, i32
  }
}

</mosaic_0001>

<llo_original>
// kernel: tpu_custom_call.1
$region0: #{tpu_custom_call.1}
  #allocation0 [shape = 'u32[]', space=smem, size = 0x4, offset = 0x4, fixed_abs, tag = 'smem constant byte address 0x4 - core index']
  #allocation1 [shape = 'u32[144,128]{1,0:T(1,128)}', space=vmem, size = 0x12000, scoped, tag = 'internal scratch']
  %s0 = inlined_call_operand.hbm [shape: f32[16,128], index: 0, kind: input, shape index: {}]
  %s1 = inlined_call_operand.hbm [shape: f32[16,128], index: 1, kind: output, shape index: {}]
  %s2 = sld [smem:[#allocation0]]
  $region41: #{tpu_custom_call.1} parent=0
    _
  %s4 = ssub.s32 1, %s2
  %s5 = scalar_select 0, %s4, %s2
  $region1: #{tpu_custom_call.1} parent=0
    #allocation2 [shape = 'u8[8192]{0}', space=vmem, size = 0x2000, scoped, tag = 'input window, operand 0']
    #allocation3 [shape = 's32[2]{0}', space=sflag, size = 0x8, scoped, tag = 'scoped memory for tpu_custom_call.1']
    #allocation4 [shape = 's32[2]{0}', space=sflag, size = 0x8, scoped, tag = 'scoped memory for tpu_custom_call.1']
    #allocation5 [shape = 'u8[8192]{0}', space=vmem, size = 0x2000, scoped, tag = 'output window, operand 0']
    %6 = vsyncpa [#allocation3], 0
    %s7 = scalar_lea.sflag [#allocation3], 1
    %8 = vsyncpa %s7, 0
    %9 = vsyncpa [#allocation4], 0
    %s10 = scalar_lea.sflag [#allocation4], 1
    %11 = vsyncpa %s10, 0
    loop: start=0, step=1, limit=4
    $region2: #{tpu_custom_call.1} parent=1 // loop_pre_header
      _
    $region3: #{tpu_custom_call.1} parent=1 // loop_header
      %s13 = sphi 0, %s17
      %p14 = scmp.ge.s32.totalorder %s13, 4
      %s23 = sphi 0, %s25
      %s26 = sphi 0, %s23
      %s27 = sphi 0, %s26
      %s43 = sphi 0, %s27
      %s49 = sphi 0, %s51
      %s52 = sphi 0, %s49
      %s53 = sphi 0, %s52
      %s69 = sphi 0, %s53
    $region4: #{tpu_custom_call.1} parent=1 // loop_header_branch
      %16 = sbr.rel (%p14) target = $region8
    $region5: #{tpu_custom_call.1} parent=1 // loop_body
      %s18 = ssub.s32 %s13, 1
      %s19 = ssub.s32 %s13, 2
      %s20 = sadd.s32 %s13, 1
      %s21 = ssub.s32 %s13, %s20
      %p22 = scmp.eq.s32.totalorder %s21, 0
      %s24 = sadd.s32 %s23, 1
      %s25 = scalar_select %p22, %s23, %s24
      %p28 = pneg %p22
      %p29 = scmp.eq.s32.totalorder %s13, 1
      %p30 = por %p28, %p29
      %p31 = scmp.ne.s32.totalorder %s23, %s26
      %p32 = scmp.eq.s32.totalorder %s13, 0
      %p33 = por %p31, %p32
      %p34 = scmp.ne.s32.totalorder %s23, %s26
      %p35 = scmp.eq.s32.totalorder %s18, 1
      %p36 = por %p34, %p35
      %p37 = scmp.ne.s32.totalorder %s26, %s27
      %p38 = scmp.eq.s32.totalorder %s18, 0
      %p39 = por %p37, %p38
      %p40 = scmp.ne.s32.totalorder %s26, %s27
      %p41 = scmp.eq.s32.totalorder %s19, 1
      %p42 = por %p40, %p41
      %p44 = scmp.ne.s32.totalorder %s27, %s43
      %p45 = scmp.eq.s32.totalorder %s19, 0
      %p46 = por %p44, %p45
      %s47 = ssub.s32 %s13, %s20
      %p48 = scmp.eq.s32.totalorder %s47, 0
      %s50 = sadd.s32 %s49, 1
      %s51 = scalar_select %p48, %s49, %s50
      %p54 = pneg %p48
      %p55 = scmp.eq.s32.totalorder %s13, 1
      %p56 = por %p54, %p55
      %p57 = scmp.ne.s32.totalorder %s49, %s52
      %p58 = scmp.eq.s32.totalorder %s13, 0
      %p59 = por %p57, %p58
      %p60 = scmp.ne.s32.totalorder %s49, %s52
      %p61 = scmp.eq.s32.totalorder %s18, 1
      %p62 = por %p60, %p61
      %p63 = scmp.ne.s32.totalorder %s52, %s53
      %p64 = scmp.eq.s32.totalorder %s18, 0
      %p65 = por %p63, %p64
      %p66 = scmp.ne.s32.totalorder %s52, %s53
      %p67 = scmp.eq.s32.totalorder %s19, 1
      %p68 = por %p66, %p67
      %p70 = scmp.ne.s32.totalorder %s53, %s69
      %p71 = scmp.eq.s32.totalorder %s19, 0
      %p72 = por %p70, %p71
      %p73 = scmp.le.s32.totalorder 1, %s13
      %p74 = scmp.lt.s32.totalorder %s13, 3
      %p75 = pnand %p73, %p74
      %p76 = pneg %p75
      // Predicated region
      $region9: #{tpu_custom_call.1} parent=5 // pred_check
        _
      $region10: #{tpu_custom_call.1} parent=5 // pred_check_branch
        %78 = sbr.rel (%p75) target = $region12
      $region11: #{tpu_custom_call.1} parent=5 // pred_region
        %s79 = ssub.s32 %s13, 1
      $region12: #{tpu_custom_call.1} parent=5 // pred_fallthru
        _
      %p80 = scmp.lt.s32.totalorder %s13, 2
      // Predicated region
      $region13: #{tpu_custom_call.1} parent=5 // pred_check
        %p81 = pneg %p80
      $region14: #{tpu_custom_call.1} parent=5 // pred_check_branch
        %83 = sbr.rel (%p81) target = $region16
      $region15: #{tpu_custom_call.1} parent=5 // pred_region
        // Predicated region
        $region17: #{tpu_custom_call.1} parent=15 // pred_check
          %p84 = pneg %p33
        $region18: #{tpu_custom_call.1} parent=15 // pred_check_branch
          %86 = sbr.rel (%p84) target = $region20
        $region19: #{tpu_custom_call.1} parent=15 // pred_region
          %s87 = sand.u32 %s23, 1
          %s88 = scalar_lea.sflag [#allocation3], %s87
          %s89 = sand.u32 %s23, 1
          %s90 = smul.addr %s89, 8
          %s91 = scalar_lea.vmem [#allocation2], %s90
          %s93 = ssub.s32 128, 128
          %94 = vsyncadd %s88, %s93
          %s95 = smul.addr %s13, 128
          %s96 = scalar_lea.hbm %s0, %s95
          %s98 = sshll.u32 %s91, 4
          %s99 = int_to_ptr.vmem [resolvable:$true] %s98
          %101 = dma.hbm_to_vmem [thread:$0]  %s96, 128, %s99, %s88
        $region20: #{tpu_custom_call.1} parent=15 // pred_fallthru
          _
      $region16: #{tpu_custom_call.1} parent=5 // pred_fallthru
        _
      %p102 = scmp.le.s32.totalorder 1, %s13
      %p103 = scmp.lt.s32.totalorder %s13, 3
      %p104 = pnand %p102, %p103
      %p105 = pneg %p104
      // Predicated region
      $region21: #{tpu_custom_call.1} parent=5 // pred_check
        _
      $region22: #{tpu_custom_call.1} parent=5 // pred_check_branch
        %107 = sbr.rel (%p104) target = $region24
      $region23: #{tpu_custom_call.1} parent=5 // pred_region
        %s108 = ssub.s32 %s13, 1
        %s109 = sand.u32 %s26, 1
        %s110 = scalar_lea.sflag [#allocation3], %s109
        %s111 = sand.u32 %s26, 1
        %s112 = smul.addr %s111, 8
        %s113 = scalar_lea.vmem [#allocation2], %s112
        // Predicated region
        $region25: #{tpu_custom_call.1} parent=23 // pred_check
          %p114 = pneg %p39
        $region26: #{tpu_custom_call.1} parent=23 // pred_check_branch
          %116 = sbr.rel (%p114) target = $region28
        $region27: #{tpu_custom_call.1} parent=23 // pred_region
          %117 = dma.done %s110, 128
        $region28: #{tpu_custom_call.1} parent=23 // pred_fallthru
          _
        %s118 = sand.u32 %s26, 1
        %s119 = scalar_lea.sflag [#allocation3], %s118
        %s120 = sand.u32 %s26, 1
        %s121 = smul.addr %s120, 8
        %s122 = scalar_lea.vmem [#allocation2], %s121
        %p123 = pneg %p39
        %p124 = pneg %p36
        %p125 = pneg %p65
        %p126 = pneg %p62
        %s127 = sand.u32 %s52, 1
        %s128 = scalar_lea.sflag [#allocation4], %s127
        %s129 = sand.u32 %s52, 1
        %s130 = smul.addr %s129, 8
        %s131 = scalar_lea.vmem [#allocation5], %s130
        %v132 = vld [vmem:[%s113] sm:$0xff]
        %v133 = vmul.f32 %v132, 0.70710677
        %v134 = vand.u32 2147483647, %v133
        %v135 = vmul.f32 %v134, 0.3275911
        %v136 = vadd.f32 %v135, 1.0
        %v137 = vrcp.pop %v136
        %v138 = vmul.f32 %v136, %v137
        %v139 = vsub.f32 2.0, %v138
        %v140 = vmul.f32 %v137, %v139
        %v141 = vmul.f32 %v140, 1.0614054
        %v142 = vadd.f32 %v141, -1.4531521
        %v143 = vmul.f32 %v140, %v142
        %v144 = vadd.f32 %v143, 1.4214138
        %v145 = vmul.f32 %v140, %v144
        %v146 = vadd.f32 %v145, -0.28449672
        %v147 = vmul.f32 %v140, %v146
        %v148 = vadd.f32 %v147, 0.2548296
        %v149 = vmul.f32 %v140, %v148
        %v150 = vmul.f32 %v132, 0.5
        %v151 = vmul.f32 %v150, %v149
        %v152 = vsub.f32 0.0, %v133
        %v153 = vmul.f32 %v152, %v133
        %v154 = vmul.f32 %v153, 1.442695
        %v155 = vpow.pop %v154
        %v156 = vmul.f32 %v151, %v155
        %vm157 = vcmp.lt.f32.partialorder %v132, 0.0
        %v158 = vsub.f32 %v132, %v156
        %v159 = vsel %vm157, %v156, %v158
        %160 = vst [vmem:[%s131] sm:$0xff] %v159
        %s161 = sand.u32 %s52, 1
        %s162 = scalar_lea.sflag [#allocation4], %s161
        %s163 = sand.u32 %s52, 1
        %s164 = smul.addr %s163, 8
        %s165 = scalar_lea.vmem [#allocation5], %s164
        // Predicated region
        $region29: #{tpu_custom_call.1} parent=23 // pred_check
          %p166 = pneg %p62
        $region30: #{tpu_custom_call.1} parent=23 // pred_check_branch
          %168 = sbr.rel (%p166) target = $region32
        $region31: #{tpu_custom_call.1} parent=23 // pred_region
          %s170 = ssub.s32 128, 128
          %171 = vsyncadd %s162, %s170
          %s172 = smul.addr %s18, 128
          %s173 = scalar_lea.hbm %s1, %s172
          %s175 = sshll.u32 %s165, 4
          %s176 = int_to_ptr.vmem [resolvable:$true] %s175
          %178 = dma.vmem_to_hbm [thread:$0]  %s176, 128, %s173, %s162
        $region32: #{tpu_custom_call.1} parent=23 // pred_fallthru
          _
      $region24: #{tpu_custom_call.1} parent=5 // pred_fallthru
        _
      %p179 = scmp.le.s32.totalorder 2, %s13
      // Predicated region
      $region33: #{tpu_custom_call.1} parent=5 // pred_check
        %p180 = pneg %p179
      $region34: #{tpu_custom_call.1} parent=5 // pred_check_branch
        %182 = sbr.rel (%p180) target = $region36
      $region35: #{tpu_custom_call.1} parent=5 // pred_region
        %s183 = ssub.s32 %s13, 2
        // Predicated region
        $region37: #{tpu_custom_call.1} parent=35 // pred_check
          %p184 = pneg %p68
        $region38: #{tpu_custom_call.1} parent=35 // pred_check_branch
          %186 = sbr.rel (%p184) target = $region40
        $region39: #{tpu_custom_call.1} parent=35 // pred_region
          %s187 = sand.u32 %s53, 1
          %s188 = scalar_lea.sflag [#allocation4], %s187
          %s189 = sand.u32 %s53, 1
          %s190 = smul.addr %s189, 8
          %s191 = scalar_lea.vmem [#allocation5], %s190
          %192 = dma.done %s188, 128
        $region40: #{tpu_custom_call.1} parent=35 // pred_fallthru
          _
      $region36: #{tpu_custom_call.1} parent=5 // pred_fallthru
        _
    $region6: #{tpu_custom_call.1} parent=1 // loop_footer
      %s17 = sadd.s32 1, %s13
    $region7: #{tpu_custom_call.1} parent=1 // loop_footer_branch
      %12 = sbr.rel target = $region3
    $region8: #{tpu_custom_call.1} parent=1 // loop_exit
      _
    %193 = vsyncpa [#allocation3], 1
    %s194 = scalar_lea.sflag [#allocation3], 1
    %195 = vsyncpa %s194, 1
    %196 = vsyncpa [#allocation4], 1
    %s197 = scalar_lea.sflag [#allocation4], 1
    %198 = vsyncpa %s197, 1

</llo_original>
